<compile_context>
chip_gen: v5e
topology: v5e:2x2
jax: 0.10.0
libtpu: 0.0.40
codegen_flags: <defaults>
</compile_context>

<pallas_src>
import jax
import jax.numpy as jnp
from jax.experimental import pallas as pl
from jax.experimental.pallas import tpu as pltpu


IN_DIM = 28 * 28      # 784
HIDDEN_PAD = 128      # 64-wide hiddens / 10-wide logits zero-padded to 128 lanes
OUT_DIM = 10


def mlp_kernel(x_ref, w1_ref, w2_ref, w3_ref, w4_ref, b_ref, o_ref):
    # x tile: (TB, 784) f32 -> cast to bf16 in-VMEM (feeds the MXU at native rate).
    x = x_ref[...].astype(jnp.bfloat16)

    # hidden1 + ReLU   (f32 accumulate, f32 activation)
    h = jnp.dot(x, w1_ref[...], preferred_element_type=jnp.float32) + b_ref[0:1, :]
    h = jnp.maximum(h, 0.0)

    # hidden2 + Sigmoid (EUP exp, f32)
    h = jnp.dot(h.astype(jnp.bfloat16), w2_ref[...],
                preferred_element_type=jnp.float32) + b_ref[1:2, :]
    h = jax.nn.sigmoid(h)

    # hidden3 + ReLU
    h = jnp.dot(h.astype(jnp.bfloat16), w3_ref[...],
                preferred_element_type=jnp.float32) + b_ref[2:3, :]
    h = jnp.maximum(h, 0.0)

    # out: lane-dense 128-wide bf16 store; cols 10..127 are exactly zero.
    o = jnp.dot(h.astype(jnp.bfloat16), w4_ref[...],
                preferred_element_type=jnp.float32) + b_ref[3:4, :]
    o_ref[...] = o.astype(o_ref.dtype)


def _round_up(n, m):
    return ((n + m - 1) // m) * m


def prepare_params(params):
    """Zero-pad to lane-dense shapes.

    Weights -> bf16 (in_features, out_features) padded to 128-wide.
    Biases  -> packed into one (4, 128) f32 array (one resident DMA).
    NOTE: all padded entries MUST remain zero (see header correctness note).
    """
    (w1, b1), (w2, b2), (w3, b3), (w4, b4) = params

    def pad_w(w, in_pad, out_pad):
        wi, wo = w.shape
        wp = jnp.zeros((in_pad, out_pad), jnp.float32).at[:wi, :wo].set(w)
        return wp.astype(jnp.bfloat16)

    def pad_b(b, out_pad):
        bf = b.reshape(-1)
        return jnp.zeros((out_pad,), jnp.float32).at[:bf.shape[0]].set(bf)

    w1p = pad_w(w1, IN_DIM, HIDDEN_PAD)
    w2p = pad_w(w2, HIDDEN_PAD, HIDDEN_PAD)
    w3p = pad_w(w3, HIDDEN_PAD, HIDDEN_PAD)
    w4p = pad_w(w4, HIDDEN_PAD, HIDDEN_PAD)
    b_all = jnp.stack([pad_b(b1, HIDDEN_PAD), pad_b(b2, HIDDEN_PAD),
                       pad_b(b3, HIDDEN_PAD), pad_b(b4, HIDDEN_PAD)], axis=0)
    return w1p, w2p, w3p, w4p, b_all


def neural_network_forward(x_nchw, params, *, tb=2048):
    """x_nchw: (B, 1, 28, 28) float32 -> logits (B, 10) float32."""
    B = x_nchw.shape[0]
    x = x_nchw.reshape(B, -1)                 # (B, 784) f32 -- no wrapper astype pass

    # Only tiny batches get padded (to the minimum 8-row sublane tile); larger
    # batches use a cdiv grid with a clipped partial last tile instead of a
    # full-array jnp.pad pass over x.
    if B < 8:
        x = jnp.pad(x, ((0, 8 - B), (0, 0)))
        Bp = 8
    else:
        Bp = B

    # Batch tile: big (amortizes per-grid-step overhead, bigger DMA bursts),
    # never larger than the batch, and for moderate batches capped near Bp/2
    # so there are >= 2 tiles for v7x's two TensorCores.
    TB = min(tb, (Bp // 8) * 8)
    if Bp > 256:
        TB = min(TB, _round_up(pl.cdiv(Bp, 2), 8))
    n_tiles = pl.cdiv(Bp, TB)

    w1, w2, w3, w4, b_all = prepare_params(params)

    def resident(shape):
        # Constant block index -> DMA'd once, stays resident across batch tiles.
        return pl.BlockSpec(shape, lambda i: (0, 0))

    flops = 2 * Bp * (IN_DIM * HIDDEN_PAD + 3 * HIDDEN_PAD * HIDDEN_PAD)
    bytes_accessed = (
        Bp * IN_DIM * 4                                     # x read (f32)
        + sum(int(a.size) * a.dtype.itemsize for a in (w1, w2, w3, w4, b_all))
        + Bp * HIDDEN_PAD * 2                               # bf16 output write
    )
    cost = pl.CostEstimate(flops=flops,
                           transcendentals=Bp * HIDDEN_PAD,  # sigmoid
                           bytes_accessed=bytes_accessed)

    out = pl.pallas_call(
        mlp_kernel,
        out_shape=jax.ShapeDtypeStruct((Bp, HIDDEN_PAD), jnp.bfloat16),
        grid=(n_tiles,),
        in_specs=[
            pl.BlockSpec((TB, IN_DIM), lambda i: (i, 0)),    # x: batch-tiled, double-buffered
            resident(w1.shape), resident(w2.shape),
            resident(w3.shape), resident(w4.shape),
            resident(b_all.shape),                           # packed (4, 128) biases
        ],
        out_specs=pl.BlockSpec((TB, HIDDEN_PAD), lambda i: (i, 0)),
        compiler_params=pltpu.CompilerParams(
            dimension_semantics=("parallel",),               # shard tiles on v7x's 2 TCs
            vmem_limit_bytes=32 * 1024 * 1024),
        cost_estimate=cost,
    )(x, w1, w2, w3, w4, b_all)

    # Rows >= B (partial-tile garbage) and lanes >= 10 (zero padding) dropped here.
    return out[:B, :OUT_DIM].astype(jnp.float32)


def init_linear(key, fan_in, fan_out):
    """Deterministic init mimicking nn.Linear default U(-1/sqrt(fan_in), +)."""
    kw, kb = jax.random.split(key)
    bound = 1.0 / jnp.sqrt(fan_in)
    # stored transposed: (in_features, out_features)
    w = jax.random.uniform(kw, (fan_in, fan_out), jnp.float32, -bound, bound)
    b = jax.random.uniform(kb, (1, fan_out), jnp.float32, -bound, bound)
    return w, b


def reference_forward(x_nchw, params):
    """Pure-JAX reference mirroring the bf16-matmul / f32-activation pipeline."""
    x = x_nchw.reshape(x_nchw.shape[0], -1)
    (w1, b1), (w2, b2), (w3, b3), (w4, b4) = params

    def mm(a, w):
        return jnp.dot(a.astype(jnp.bfloat16), w.astype(jnp.bfloat16),
                       preferred_element_type=jnp.float32)

    h = jnp.maximum(mm(x, w1) + b1, 0.0)
    h = jax.nn.sigmoid(mm(h, w2) + b2)
    h = jnp.maximum(mm(h, w3) + b3, 0.0)
    return mm(h, w4) + b4


if __name__ == "__main__":
    key = jax.random.PRNGKey(0)
    k_x, k1, k2, k3, k4 = jax.random.split(key, 5)

    B = 2
    x = jax.random.normal(k_x, (B, 1, 28, 28), jnp.float32)

    params = (
        init_linear(k1, 28 * 28, 128),
        init_linear(k2, 128, 64),
        init_linear(k3, 64, 64),
        init_linear(k4, 64, 10),
    )

    out = jax.block_until_ready(neural_network_forward(x, params))
    ref = reference_forward(x, params)

    assert out.shape == (B, 10)
    # bf16 output rounding + bf16 matmuls -> a slightly looser tolerance.
    assert jnp.allclose(out, ref, atol=1.5e-2, rtol=1.5e-2), \
        float(jnp.max(jnp.abs(out - ref)))

    print("KERNEL_OK")
</pallas_src>

<mosaic_0001>
module attributes {stable_mosaic.version = 11 : i64} {
  func.func @mlp_kernel(%arg0: i32, %arg1: memref<8x784xf32, #tpu.memory_space<vmem>>, %arg2: memref<784x128xbf16, #tpu.memory_space<vmem>>, %arg3: memref<128x128xbf16, #tpu.memory_space<vmem>>, %arg4: memref<128x128xbf16, #tpu.memory_space<vmem>>, %arg5: memref<128x128xbf16, #tpu.memory_space<vmem>>, %arg6: memref<4x128xf32, #tpu.memory_space<vmem>>, %arg7: memref<8x128xbf16, #tpu.memory_space<vmem>>) attributes {dimension_semantics = [#tpu.dimension_semantics<parallel>], iteration_bounds = array<i64: 1>, scalar_prefetch = 0 : i64, scratch_operands = 0 : i64, tpu.core_type = #tpu.core_type<tc>, window_params = [{transform_indices = @transform_0, window_bounds = array<i64: 8, 784>}, {pipeline_mode = #tpu.pipeline_mode<synchronous>, transform_indices = @transform_1, window_bounds = array<i64: 784, 128>}, {pipeline_mode = #tpu.pipeline_mode<synchronous>, transform_indices = @transform_2, window_bounds = array<i64: 128, 128>}, {pipeline_mode = #tpu.pipeline_mode<synchronous>, transform_indices = @transform_3, window_bounds = array<i64: 128, 128>}, {pipeline_mode = #tpu.pipeline_mode<synchronous>, transform_indices = @transform_4, window_bounds = array<i64: 128, 128>}, {pipeline_mode = #tpu.pipeline_mode<synchronous>, transform_indices = @transform_5, window_bounds = array<i64: 4, 128>}, {transform_indices = @transform_6, window_bounds = array<i64: 8, 128>}]} {
    %c0 = arith.constant 0 : index
    %c0_0 = arith.constant 0 : index
    %0 = vector.load %arg1[%c0, %c0_0] : memref<8x784xf32, #tpu.memory_space<vmem>>, vector<8x784xf32>
    %1 = arith.truncf %0 : vector<8x784xf32> to vector<8x784xbf16>
    %c0_1 = arith.constant 0 : index
    %c0_2 = arith.constant 0 : index
    %2 = vector.load %arg2[%c0_1, %c0_2] : memref<784x128xbf16, #tpu.memory_space<vmem>>, vector<784x128xbf16>
    %cst = arith.constant dense<0.000000e+00> : vector<8x128xf32>
    %3 = tpu.matmul %1, %2, %cst {dimension_numbers = #tpu.dot_dimension_numbers<[1], [0], [0], [1], [0, 0, 1, 1], [], []>} : vector<8x784xbf16>, vector<784x128xbf16>, vector<8x128xf32> -> vector<8x128xf32>
    %c0_3 = arith.constant 0 : index
    %c0_4 = arith.constant 0 : index
    %4 = vector.load %arg6[%c0_3, %c0_4] : memref<4x128xf32, #tpu.memory_space<vmem>>, vector<1x128xf32>
    %5 = vector.broadcast %4 : vector<1x128xf32> to vector<8x128xf32>
    %6 = arith.addf %3, %5 : vector<8x128xf32>
    %cst_5 = arith.constant 0.000000e+00 : f32
    %7 = vector.broadcast %cst_5 : f32 to vector<8x128xf32>
    %8 = arith.maximumf %6, %7 : vector<8x128xf32>
    %9 = arith.truncf %8 : vector<8x128xf32> to vector<8x128xbf16>
    %c0_6 = arith.constant 0 : index
    %c0_7 = arith.constant 0 : index
    %10 = vector.load %arg3[%c0_6, %c0_7] : memref<128x128xbf16, #tpu.memory_space<vmem>>, vector<128x128xbf16>
    %cst_8 = arith.constant dense<0.000000e+00> : vector<8x128xf32>
    %11 = tpu.matmul %9, %10, %cst_8 {dimension_numbers = #tpu.dot_dimension_numbers<[1], [0], [0], [1], [0, 0, 1, 1], [], []>} : vector<8x128xbf16>, vector<128x128xbf16>, vector<8x128xf32> -> vector<8x128xf32>
    %c1 = arith.constant 1 : index
    %c0_9 = arith.constant 0 : index
    %12 = vector.load %arg6[%c1, %c0_9] : memref<4x128xf32, #tpu.memory_space<vmem>>, vector<1x128xf32>
    %13 = vector.broadcast %12 : vector<1x128xf32> to vector<8x128xf32>
    %14 = arith.addf %11, %13 : vector<8x128xf32>
    %15 = arith.negf %14 : vector<8x128xf32>
    %16 = math.exp %15 : vector<8x128xf32>
    %cst_10 = arith.constant 1.000000e+00 : f32
    %17 = vector.broadcast %cst_10 : f32 to vector<8x128xf32>
    %18 = arith.addf %17, %16 : vector<8x128xf32>
    %19 = arith.divf %17, %18 : vector<8x128xf32>
    %20 = arith.truncf %19 : vector<8x128xf32> to vector<8x128xbf16>
    %c0_11 = arith.constant 0 : index
    %c0_12 = arith.constant 0 : index
    %21 = vector.load %arg4[%c0_11, %c0_12] : memref<128x128xbf16, #tpu.memory_space<vmem>>, vector<128x128xbf16>
    %cst_13 = arith.constant dense<0.000000e+00> : vector<8x128xf32>
    %22 = tpu.matmul %20, %21, %cst_13 {dimension_numbers = #tpu.dot_dimension_numbers<[1], [0], [0], [1], [0, 0, 1, 1], [], []>} : vector<8x128xbf16>, vector<128x128xbf16>, vector<8x128xf32> -> vector<8x128xf32>
    %c2 = arith.constant 2 : index
    %c0_14 = arith.constant 0 : index
    %23 = vector.load %arg6[%c2, %c0_14] : memref<4x128xf32, #tpu.memory_space<vmem>>, vector<1x128xf32>
    %24 = vector.broadcast %23 : vector<1x128xf32> to vector<8x128xf32>
    %25 = arith.addf %22, %24 : vector<8x128xf32>
    %cst_15 = arith.constant 0.000000e+00 : f32
    %26 = vector.broadcast %cst_15 : f32 to vector<8x128xf32>
    %27 = arith.maximumf %25, %26 : vector<8x128xf32>
    %28 = arith.truncf %27 : vector<8x128xf32> to vector<8x128xbf16>
    %c0_16 = arith.constant 0 : index
    %c0_17 = arith.constant 0 : index
    %29 = vector.load %arg5[%c0_16, %c0_17] : memref<128x128xbf16, #tpu.memory_space<vmem>>, vector<128x128xbf16>
    %cst_18 = arith.constant dense<0.000000e+00> : vector<8x128xf32>
    %30 = tpu.matmul %28, %29, %cst_18 {dimension_numbers = #tpu.dot_dimension_numbers<[1], [0], [0], [1], [0, 0, 1, 1], [], []>} : vector<8x128xbf16>, vector<128x128xbf16>, vector<8x128xf32> -> vector<8x128xf32>
    %c3 = arith.constant 3 : index
    %c0_19 = arith.constant 0 : index
    %31 = vector.load %arg6[%c3, %c0_19] : memref<4x128xf32, #tpu.memory_space<vmem>>, vector<1x128xf32>
    %32 = vector.broadcast %31 : vector<1x128xf32> to vector<8x128xf32>
    %33 = arith.addf %30, %32 : vector<8x128xf32>
    %34 = arith.truncf %33 : vector<8x128xf32> to vector<8x128xbf16>
    %c0_20 = arith.constant 0 : index
    %c0_21 = arith.constant 0 : index
    %35 = vector.load %arg7[%c0_20, %c0_21] : memref<8x128xbf16, #tpu.memory_space<vmem>>, vector<8x128xbf16>
    tpu.vector_store %arg7[%c0_20, %c0_21], %34 {strides = array<i32>} : memref<8x128xbf16, #tpu.memory_space<vmem>>, vector<8x128xbf16>,
    return
  }
  func.func @transform_0(%arg0: i32) -> (i32, i32) {
    %c0_i32 = arith.constant 0 : i32
    %c0_i32_0 = arith.constant 0 : i32
    return %arg0, %c0_i32 : i32, i32
  }
  func.func @transform_1(%arg0: i32) -> (i32, i32) {
    %c0_i32 = arith.constant 0 : i32
    %c0_i32_0 = arith.constant 0 : i32
    %c0_i32_1 = arith.constant 0 : i32
    return %c0_i32, %c0_i32_0 : i32, i32
  }
  func.func @transform_2(%arg0: i32) -> (i32, i32) {
    %c0_i32 = arith.constant 0 : i32
    %c0_i32_0 = arith.constant 0 : i32
    %c0_i32_1 = arith.constant 0 : i32
    return %c0_i32, %c0_i32_0 : i32, i32
  }
  func.func @transform_3(%arg0: i32) -> (i32, i32) {
    %c0_i32 = arith.constant 0 : i32
    %c0_i32_0 = arith.constant 0 : i32
    %c0_i32_1 = arith.constant 0 : i32
    return %c0_i32, %c0_i32_0 : i32, i32
  }
  func.func @transform_4(%arg0: i32) -> (i32, i32) {
    %c0_i32 = arith.constant 0 : i32
    %c0_i32_0 = arith.constant 0 : i32
    %c0_i32_1 = arith.constant 0 : i32
    return %c0_i32, %c0_i32_0 : i32, i32
  }
  func.func @transform_5(%arg0: i32) -> (i32, i32) {
    %c0_i32 = arith.constant 0 : i32
    %c0_i32_0 = arith.constant 0 : i32
    %c0_i32_1 = arith.constant 0 : i32
    return %c0_i32, %c0_i32_0 : i32, i32
  }
  func.func @transform_6(%arg0: i32) -> (i32, i32) {
    %c0_i32 = arith.constant 0 : i32
    %c0_i32_0 = arith.constant 0 : i32
    return %arg0, %c0_i32 : i32, i32
  }
}

</mosaic_0001>

<llo_original>
// kernel: tpu_custom_call.1
$region0: #{tpu_custom_call.1}
  #allocation0 [shape = 'u32[]', space=smem, size = 0x4, offset = 0x4, fixed_abs, tag = 'smem constant byte address 0x4 - core index']
  #allocation1 [shape = 'u32[72,128]{1,0:T(1,128)}', space=vmem, size = 0x9000, scoped, tag = 'internal scratch']
  %s0 = inlined_call_operand.hbm [shape: f32[8,784], index: 0, kind: input, shape index: {}]
  %s1 = inlined_call_operand.hbm [shape: bf16[784,128], index: 1, kind: input, shape index: {}]
  %s2 = inlined_call_operand.hbm [shape: bf16[128,128], index: 2, kind: input, shape index: {}]
  %s3 = inlined_call_operand.hbm [shape: bf16[128,128], index: 3, kind: input, shape index: {}]
  %s4 = inlined_call_operand.hbm [shape: bf16[128,128], index: 4, kind: input, shape index: {}]
  %s5 = inlined_call_operand.vmem [shape: f32[4,128], index: 5, kind: input, shape index: {}]
  %s6 = inlined_call_operand.hbm [shape: bf16[8,128], index: 6, kind: output, shape index: {}]
  %s7 = sld [smem:[#allocation0]]
  $region54: #{tpu_custom_call.1} parent=0
    _
  %s9 = ssub.s32 1, %s7
  %s10 = scalar_select 0, %s9, %s7
  $region1: #{tpu_custom_call.1} parent=0
    #allocation2 [shape = 'u8[28672]{0}', space=vmem, size = 0x7000, scoped, tag = 'input window, operand 0, single buffered']
    #allocation3 [shape = 's32[1]{0}', space=sflag, size = 0x4, scoped, tag = 'scoped memory for tpu_custom_call.1']
    #allocation4 [shape = 's32[1]{0}', space=sflag, size = 0x4, scoped, tag = 'scoped memory for tpu_custom_call.1']
    #allocation5 [shape = 'u8[200704]{0}', space=vmem, size = 0x31000, scoped, tag = 'input window, operand 1, single buffered']
    #allocation6 [shape = 's32[1]{0}', space=sflag, size = 0x4, scoped, tag = 'scoped memory for tpu_custom_call.1']
    #allocation7 [shape = 'u8[32768]{0}', space=vmem, size = 0x8000, scoped, tag = 'input window, operand 2, single buffered']
    #allocation8 [shape = 'u8[32768]{0}', space=vmem, size = 0x8000, scoped, tag = 'input window, operand 3, single buffered']
    #allocation9 [shape = 's32[1]{0}', space=sflag, size = 0x4, scoped, tag = 'scoped memory for tpu_custom_call.1']
    #allocation10 [shape = 'u8[32768]{0}', space=vmem, size = 0x8000, scoped, tag = 'input window, operand 4, single buffered']
    #allocation11 [shape = 'u8[2048]{0}', space=vmem, size = 0x800, scoped, tag = 'output window, operand 0, single buffered']
    %11 = vsyncpa [#allocation3], 0
    %12 = vsyncpa [#allocation6], 0
    %13 = vsyncpa [#allocation9], 0
    %14 = vsyncpa [#allocation4], 0
    // Predicated region
    $region2: #{tpu_custom_call.1} parent=1 // pred_check
      _
    $region3: #{tpu_custom_call.1} parent=1 // pred_check_branch
      %16 = sbr.rel (0) target = $region5
    $region4: #{tpu_custom_call.1} parent=1 // pred_region
      %18 = vsyncadd [#allocation3], 0
      %s20 = sshll.u32 %s0, 4
      %s21 = int_to_ptr.hbm [resolvable:$true] %s20
      %s22 = sshll.u32 [#allocation2], 4
      %s23 = int_to_ptr.vmem [resolvable:$true] %s22
      %25 = dma.hbm_to_vmem [thread:$0]  %s21, 896, %s23, [#allocation3]
    $region5: #{tpu_custom_call.1} parent=1 // pred_fallthru
      _
    // Predicated region
    $region6: #{tpu_custom_call.1} parent=1 // pred_check
      _
    $region7: #{tpu_custom_call.1} parent=1 // pred_check_branch
      %27 = sbr.rel (0) target = $region9
    $region8: #{tpu_custom_call.1} parent=1 // pred_region
      %29 = vsyncadd [#allocation6], 0
      %s30 = sshll.u32 %s1, 4
      %s31 = int_to_ptr.hbm [resolvable:$true] %s30
      %s32 = sshll.u32 [#allocation5], 4
      %s33 = int_to_ptr.vmem [resolvable:$true] %s32
      %38 = dma.hbm_to_vmem [thread:$0]  %s31, 6272, %s33, [#allocation6], 64, 64, 4
    $region9: #{tpu_custom_call.1} parent=1 // pred_fallthru
      _
    // Predicated region
    $region10: #{tpu_custom_call.1} parent=1 // pred_check
      _
    $region11: #{tpu_custom_call.1} parent=1 // pred_check_branch
      %40 = sbr.rel (0) target = $region13
    $region12: #{tpu_custom_call.1} parent=1 // pred_region
      %42 = vsyncadd [#allocation6], 0
      %s43 = sshll.u32 %s2, 4
      %s44 = int_to_ptr.hbm [resolvable:$true] %s43
      %s45 = sshll.u32 [#allocation7], 4
      %s46 = int_to_ptr.vmem [resolvable:$true] %s45
      %51 = dma.hbm_to_vmem [thread:$0]  %s44, 1024, %s46, [#allocation6], 64, 64, 4
    $region13: #{tpu_custom_call.1} parent=1 // pred_fallthru
      _
    // Predicated region
    $region14: #{tpu_custom_call.1} parent=1 // pred_check
      _
    $region15: #{tpu_custom_call.1} parent=1 // pred_check_branch
      %53 = sbr.rel (0) target = $region17
    $region16: #{tpu_custom_call.1} parent=1 // pred_region
      %55 = vsyncadd [#allocation9], 0
      %s56 = sshll.u32 %s3, 4
      %s57 = int_to_ptr.hbm [resolvable:$true] %s56
      %s58 = sshll.u32 [#allocation8], 4
      %s59 = int_to_ptr.vmem [resolvable:$true] %s58
      %64 = dma.hbm_to_vmem [thread:$0]  %s57, 1024, %s59, [#allocation9], 64, 64, 4
    $region17: #{tpu_custom_call.1} parent=1 // pred_fallthru
      _
    // Predicated region
    $region18: #{tpu_custom_call.1} parent=1 // pred_check
      _
    $region19: #{tpu_custom_call.1} parent=1 // pred_check_branch
      %66 = sbr.rel (0) target = $region21
    $region20: #{tpu_custom_call.1} parent=1 // pred_region
      %68 = vsyncadd [#allocation9], 0
      %s69 = sshll.u32 %s4, 4
      %s70 = int_to_ptr.hbm [resolvable:$true] %s69
      %s71 = sshll.u32 [#allocation10], 4
      %s72 = int_to_ptr.vmem [resolvable:$true] %s71
      %77 = dma.hbm_to_vmem [thread:$0]  %s70, 1024, %s72, [#allocation9], 64, 64, 4
    $region21: #{tpu_custom_call.1} parent=1 // pred_fallthru
      _
    // Predicated region
    $region22: #{tpu_custom_call.1} parent=1 // pred_check
      _
    $region23: #{tpu_custom_call.1} parent=1 // pred_check_branch
      %79 = sbr.rel (0) target = $region25
    $region24: #{tpu_custom_call.1} parent=1 // pred_region
      _
    $region25: #{tpu_custom_call.1} parent=1 // pred_fallthru
      _
    // Predicated region
    $region26: #{tpu_custom_call.1} parent=1 // pred_check
      _
    $region27: #{tpu_custom_call.1} parent=1 // pred_check_branch
      %81 = sbr.rel (0) target = $region29
    $region28: #{tpu_custom_call.1} parent=1 // pred_region
      %83 = dma.done [#allocation3], 896
    $region29: #{tpu_custom_call.1} parent=1 // pred_fallthru
      _
    // Predicated region
    $region30: #{tpu_custom_call.1} parent=1 // pred_check
      _
    $region31: #{tpu_custom_call.1} parent=1 // pred_check_branch
      %85 = sbr.rel (0) target = $region33
    $region32: #{tpu_custom_call.1} parent=1 // pred_region
      %87 = dma.done [#allocation6], 6272
    $region33: #{tpu_custom_call.1} parent=1 // pred_fallthru
      _
    // Predicated region
    $region34: #{tpu_custom_call.1} parent=1 // pred_check
      _
    $region35: #{tpu_custom_call.1} parent=1 // pred_check_branch
      %89 = sbr.rel (0) target = $region37
    $region36: #{tpu_custom_call.1} parent=1 // pred_region
      %91 = dma.done [#allocation6], 1024
    $region37: #{tpu_custom_call.1} parent=1 // pred_fallthru
      _
    // Predicated region
    $region38: #{tpu_custom_call.1} parent=1 // pred_check
      _
    $region39: #{tpu_custom_call.1} parent=1 // pred_check_branch
      %93 = sbr.rel (0) target = $region41
    $region40: #{tpu_custom_call.1} parent=1 // pred_region
      %95 = dma.done [#allocation9], 1024
    $region41: #{tpu_custom_call.1} parent=1 // pred_fallthru
      _
    // Predicated region
    $region42: #{tpu_custom_call.1} parent=1 // pred_check
      _
    $region43: #{tpu_custom_call.1} parent=1 // pred_check_branch
      %97 = sbr.rel (0) target = $region45
    $region44: #{tpu_custom_call.1} parent=1 // pred_region
      %99 = dma.done [#allocation9], 1024
    $region45: #{tpu_custom_call.1} parent=1 // pred_fallthru
      _
    %v101 = vld [vmem:[#allocation2] sm:$0xff]
    %v102 = vld [vmem:[#allocation2 + $0x8] sm:$0xff]
    %v103 = vld [vmem:[#allocation2 + $0x10] sm:$0xff]
    %v104 = vld [vmem:[#allocation2 + $0x18] sm:$0xff]
    %v105 = vld [vmem:[#allocation2 + $0x20] sm:$0xff]
    %v106 = vld [vmem:[#allocation2 + $0x28] sm:$0xff]
    %v107 = vld [vmem:[#allocation2 + $0x30] sm:$0xff]
    %v108 = vpack.c.bf16 %v101, %v101
    %v109 = vpack.c.bf16 %v102, %v102
    %v110 = vpack.c.bf16 %v103, %v103
    %v111 = vpack.c.bf16 %v104, %v104
    %v112 = vpack.c.bf16 %v105, %v105
    %v113 = vpack.c.bf16 %v106, %v106
    %v114 = vpack.c.bf16 %v107, %v107
    %v115 = vld [vmem:[#allocation5] sm:$0xf]
    %v116 = vld [vmem:[#allocation5 + $0x4] sm:$0xf]
    %v117 = vld [vmem:[#allocation5 + $0x8] sm:$0xf]
    %v118 = vld [vmem:[#allocation5 + $0xc] sm:$0xf]
    %v119 = vld [vmem:[#allocation5 + $0x10] sm:$0xf]
    %v120 = vld [vmem:[#allocation5 + $0x14] sm:$0xf]
    %v121 = vld [vmem:[#allocation5 + $0x18] sm:$0xf]
    %v122 = vld [vmem:[#allocation5 + $0x1c] sm:$0xf]
    %v123 = vld [vmem:[#allocation5 + $0x20] sm:$0xf]
    %v124 = vld [vmem:[#allocation5 + $0x24] sm:$0xf]
    %v125 = vld [vmem:[#allocation5 + $0x28] sm:$0xf]
    %v126 = vld [vmem:[#allocation5 + $0x2c] sm:$0xf]
    %v127 = vld [vmem:[#allocation5 + $0x30] sm:$0xf]
    %v128 = vld [vmem:[#allocation5 + $0x34] sm:$0xf]
    %v129 = vld [vmem:[#allocation5 + $0x38] sm:$0xf]
    %v130 = vld [vmem:[#allocation5 + $0x3c] sm:$0xf]
    %v131 = vld [vmem:[#allocation5 + $0x40] sm:$0xf]
    %v132 = vld [vmem:[#allocation5 + $0x44] sm:$0xf]
    %v133 = vld [vmem:[#allocation5 + $0x48] sm:$0xf]
    %v134 = vld [vmem:[#allocation5 + $0x4c] sm:$0xf]
    %v135 = vld [vmem:[#allocation5 + $0x50] sm:$0xf]
    %v136 = vld [vmem:[#allocation5 + $0x54] sm:$0xf]
    %v137 = vld [vmem:[#allocation5 + $0x58] sm:$0xf]
    %v138 = vld [vmem:[#allocation5 + $0x5c] sm:$0xf]
    %v139 = vld [vmem:[#allocation5 + $0x60] sm:$0xf]
    %v140 = vld [vmem:[#allocation5 + $0x64] sm:$0xf]
    %v141 = vld [vmem:[#allocation5 + $0x68] sm:$0xf]
    %v142 = vld [vmem:[#allocation5 + $0x6c] sm:$0xf]
    %v143 = vld [vmem:[#allocation5 + $0x70] sm:$0xf]
    %v144 = vld [vmem:[#allocation5 + $0x74] sm:$0xf]
    %v145 = vld [vmem:[#allocation5 + $0x78] sm:$0xf]
    %v146 = vld [vmem:[#allocation5 + $0x7c] sm:$0xf]
    %v147 = vld [vmem:[#allocation5 + $0x80] sm:$0xf]
    %v148 = vld [vmem:[#allocation5 + $0x84] sm:$0xf]
    %v149 = vld [vmem:[#allocation5 + $0x88] sm:$0xf]
    %v150 = vld [vmem:[#allocation5 + $0x8c] sm:$0xf]
    %v151 = vld [vmem:[#allocation5 + $0x90] sm:$0xf]
    %v152 = vld [vmem:[#allocation5 + $0x94] sm:$0xf]
    %v153 = vld [vmem:[#allocation5 + $0x98] sm:$0xf]
    %v154 = vld [vmem:[#allocation5 + $0x9c] sm:$0xf]
    %v155 = vld [vmem:[#allocation5 + $0xa0] sm:$0xf]
    %v156 = vld [vmem:[#allocation5 + $0xa4] sm:$0xf]
    %v157 = vld [vmem:[#allocation5 + $0xa8] sm:$0xf]
    %v158 = vld [vmem:[#allocation5 + $0xac] sm:$0xf]
    %v159 = vld [vmem:[#allocation5 + $0xb0] sm:$0xf]
    %v160 = vld [vmem:[#allocation5 + $0xb4] sm:$0xf]
    %v161 = vld [vmem:[#allocation5 + $0xb8] sm:$0xf]
    %v162 = vld [vmem:[#allocation5 + $0xbc] sm:$0xf]
    %v163 = vld [vmem:[#allocation5 + $0xc0] sm:$0xf]
    %v164 = vld [vmem:[#allocation5 + $0xc4] sm:$0xf]
    %v165 = vld [vmem:[#allocation5 + $0xc8] sm:$0xf]
    %v166 = vld [vmem:[#allocation5 + $0xcc] sm:$0xf]
    %v167 = vld [vmem:[#allocation5 + $0xd0] sm:$0xf]
    %v168 = vld [vmem:[#allocation5 + $0xd4] sm:$0xf]
    %v169 = vld [vmem:[#allocation5 + $0xd8] sm:$0xf]
    %v170 = vld [vmem:[#allocation5 + $0xdc] sm:$0xf]
    %v171 = vld [vmem:[#allocation5 + $0xe0] sm:$0xf]
    %v172 = vld [vmem:[#allocation5 + $0xe4] sm:$0xf]
    %v173 = vld [vmem:[#allocation5 + $0xe8] sm:$0xf]
    %v174 = vld [vmem:[#allocation5 + $0xec] sm:$0xf]
    %v175 = vld [vmem:[#allocation5 + $0xf0] sm:$0xf]
    %v176 = vld [vmem:[#allocation5 + $0xf4] sm:$0xf]
    %v177 = vld [vmem:[#allocation5 + $0xf8] sm:$0xf]
    %v178 = vld [vmem:[#allocation5 + $0xfc] sm:$0xf]
    %v179 = vld [vmem:[#allocation5 + $0x100] sm:$0xf]
    %v180 = vld [vmem:[#allocation5 + $0x104] sm:$0xf]
    %v181 = vld [vmem:[#allocation5 + $0x108] sm:$0xf]
    %v182 = vld [vmem:[#allocation5 + $0x10c] sm:$0xf]
    %v183 = vld [vmem:[#allocation5 + $0x110] sm:$0xf]
    %v184 = vld [vmem:[#allocation5 + $0x114] sm:$0xf]
    %v185 = vld [vmem:[#allocation5 + $0x118] sm:$0xf]
    %v186 = vld [vmem:[#allocation5 + $0x11c] sm:$0xf]
    %v187 = vld [vmem:[#allocation5 + $0x120] sm:$0xf]
    %v188 = vld [vmem:[#allocation5 + $0x124] sm:$0xf]
    %v189 = vld [vmem:[#allocation5 + $0x128] sm:$0xf]
    %v190 = vld [vmem:[#allocation5 + $0x12c] sm:$0xf]
    %v191 = vld [vmem:[#allocation5 + $0x130] sm:$0xf]
    %v192 = vld [vmem:[#allocation5 + $0x134] sm:$0xf]
    %v193 = vld [vmem:[#allocation5 + $0x138] sm:$0xf]
    %v194 = vld [vmem:[#allocation5 + $0x13c] sm:$0xf]
    %v195 = vld [vmem:[#allocation5 + $0x140] sm:$0xf]
    %v196 = vld [vmem:[#allocation5 + $0x144] sm:$0xf]
    %v197 = vld [vmem:[#allocation5 + $0x148] sm:$0xf]
    %v198 = vld [vmem:[#allocation5 + $0x14c] sm:$0xf]
    %v199 = vld [vmem:[#allocation5 + $0x150] sm:$0xf]
    %v200 = vld [vmem:[#allocation5 + $0x154] sm:$0xf]
    %v201 = vld [vmem:[#allocation5 + $0x158] sm:$0xf]
    %v202 = vld [vmem:[#allocation5 + $0x15c] sm:$0xf]
    %v203 = vld [vmem:[#allocation5 + $0x160] sm:$0xf]
    %v204 = vld [vmem:[#allocation5 + $0x164] sm:$0xf]
    %v205 = vld [vmem:[#allocation5 + $0x168] sm:$0xf]
    %v206 = vld [vmem:[#allocation5 + $0x16c] sm:$0xf]
    %v207 = vld [vmem:[#allocation5 + $0x170] sm:$0xf]
    %v208 = vld [vmem:[#allocation5 + $0x174] sm:$0xf]
    %v209 = vld [vmem:[#allocation5 + $0x178] sm:$0xf]
    %v210 = vld [vmem:[#allocation5 + $0x17c] sm:$0xf]
    %v211 = vld [vmem:[#allocation5 + $0x180] sm:$0xf]
    %v212 = vld [vmem:[#allocation5 + $0x184] sm:$0xf]
    %v213 = vld [vmem:[%s5] sm:$0x1]
    %v214 = vperm.slane %v213, 0
    %v313 = vunpack.c.l.b16 %v115
    %v314 = vunpack.c.l.b16 %v116
    %v315 = vunpack.c.l.b16 %v117
    %v316 = vunpack.c.l.b16 %v118
    %v317 = vunpack.c.l.b16 %v119
    %v318 = vunpack.c.l.b16 %v120
    %v319 = vunpack.c.l.b16 %v121
    %v320 = vunpack.c.l.b16 %v122
    %v321 = vunpack.c.l.b16 %v123
    %v322 = vunpack.c.l.b16 %v124
    %v323 = vunpack.c.l.b16 %v125
    %v324 = vunpack.c.l.b16 %v126
    %v325 = vunpack.c.l.b16 %v127
    %v326 = vunpack.c.l.b16 %v128
    %v327 = vunpack.c.l.b16 %v129
    %v328 = vunpack.c.l.b16 %v130
    %v329 = vunpack.c.l.b16 %v131
    %v330 = vunpack.c.l.b16 %v132
    %v331 = vunpack.c.l.b16 %v133
    %v332 = vunpack.c.l.b16 %v134
    %v333 = vunpack.c.l.b16 %v135
    %v334 = vunpack.c.l.b16 %v136
    %v335 = vunpack.c.l.b16 %v137
    %v336 = vunpack.c.l.b16 %v138
    %v337 = vunpack.c.l.b16 %v139
    %v338 = vunpack.c.l.b16 %v140
    %v339 = vunpack.c.l.b16 %v141
    %v340 = vunpack.c.l.b16 %v142
    %v341 = vunpack.c.l.b16 %v143
    %v342 = vunpack.c.l.b16 %v144
    %v343 = vunpack.c.l.b16 %v145
    %v344 = vunpack.c.l.b16 %v146
    %v345 = vunpack.c.l.b16 %v147
    %v346 = vunpack.c.l.b16 %v148
    %v347 = vunpack.c.l.b16 %v149
    %v348 = vunpack.c.l.b16 %v150
    %v349 = vunpack.c.l.b16 %v151
    %v350 = vunpack.c.l.b16 %v152
    %v351 = vunpack.c.l.b16 %v153
    %v352 = vunpack.c.l.b16 %v154
    %v353 = vunpack.c.l.b16 %v155
    %v354 = vunpack.c.l.b16 %v156
    %v355 = vunpack.c.l.b16 %v157
    %v356 = vunpack.c.l.b16 %v158
    %v357 = vunpack.c.l.b16 %v159
    %v358 = vunpack.c.l.b16 %v160
    %v359 = vunpack.c.l.b16 %v161
    %v360 = vunpack.c.l.b16 %v162
    %v361 = vunpack.c.l.b16 %v163
    %v362 = vunpack.c.l.b16 %v164
    %v363 = vunpack.c.l.b16 %v165
    %v364 = vunpack.c.l.b16 %v166
    %v365 = vunpack.c.l.b16 %v167
    %v366 = vunpack.c.l.b16 %v168
    %v367 = vunpack.c.l.b16 %v169
    %v368 = vunpack.c.l.b16 %v170
    %v369 = vunpack.c.l.b16 %v171
    %v370 = vunpack.c.l.b16 %v172
    %v371 = vunpack.c.l.b16 %v173
    %v372 = vunpack.c.l.b16 %v174
    %v373 = vunpack.c.l.b16 %v175
    %v374 = vunpack.c.l.b16 %v176
    %v375 = vunpack.c.l.b16 %v177
    %v376 = vunpack.c.l.b16 %v178
    %v377 = vunpack.c.l.b16 %v179
    %v378 = vunpack.c.l.b16 %v180
    %v379 = vunpack.c.l.b16 %v181
    %v380 = vunpack.c.l.b16 %v182
    %v381 = vunpack.c.l.b16 %v183
    %v382 = vunpack.c.l.b16 %v184
    %v383 = vunpack.c.l.b16 %v185
    %v384 = vunpack.c.l.b16 %v186
    %v385 = vunpack.c.l.b16 %v187
    %v386 = vunpack.c.l.b16 %v188
    %v387 = vunpack.c.l.b16 %v189
    %v388 = vunpack.c.l.b16 %v190
    %v389 = vunpack.c.l.b16 %v191
    %v390 = vunpack.c.l.b16 %v192
    %v391 = vunpack.c.l.b16 %v193
    %v392 = vunpack.c.l.b16 %v194
    %v393 = vunpack.c.l.b16 %v195
    %v394 = vunpack.c.l.b16 %v196
    %v395 = vunpack.c.l.b16 %v197
    %v396 = vunpack.c.l.b16 %v198
    %v397 = vunpack.c.l.b16 %v199
    %v398 = vunpack.c.l.b16 %v200
    %v399 = vunpack.c.l.b16 %v201
    %v400 = vunpack.c.l.b16 %v202
    %v401 = vunpack.c.l.b16 %v203
    %v402 = vunpack.c.l.b16 %v204
    %v403 = vunpack.c.l.b16 %v205
    %v404 = vunpack.c.l.b16 %v206
    %v405 = vunpack.c.l.b16 %v207
    %v406 = vunpack.c.l.b16 %v208
    %v407 = vunpack.c.l.b16 %v209
    %v408 = vunpack.c.l.b16 %v210
    %v409 = vunpack.c.l.b16 %v211
    %v410 = vunpack.c.l.b16 %v212
    %v411 = vpack.c.b16 %v314, %v313
    %v412 = vpack.c.b16 %v316, %v315
    %v413 = vpack.c.b16 %v318, %v317
    %v414 = vpack.c.b16 %v320, %v319
    %v415 = vpack.c.b16 %v322, %v321
    %v416 = vpack.c.b16 %v324, %v323
    %v417 = vpack.c.b16 %v326, %v325
    %v418 = vpack.c.b16 %v328, %v327
    %v419 = vpack.c.b16 %v330, %v329
    %v420 = vpack.c.b16 %v332, %v331
    %v421 = vpack.c.b16 %v334, %v333
    %v422 = vpack.c.b16 %v336, %v335
    %v423 = vpack.c.b16 %v338, %v337
    %v424 = vpack.c.b16 %v340, %v339
    %v425 = vpack.c.b16 %v342, %v341
    %v426 = vpack.c.b16 %v344, %v343
    %v427 = vpack.c.b16 %v346, %v345
    %v428 = vpack.c.b16 %v348, %v347
    %v429 = vpack.c.b16 %v350, %v349
    %v430 = vpack.c.b16 %v352, %v351
    %v431 = vpack.c.b16 %v354, %v353
    %v432 = vpack.c.b16 %v356, %v355
    %v433 = vpack.c.b16 %v358, %v357
    %v434 = vpack.c.b16 %v360, %v359
    %v435 = vpack.c.b16 %v362, %v361
    %v436 = vpack.c.b16 %v364, %v363
    %v437 = vpack.c.b16 %v366, %v365
    %v438 = vpack.c.b16 %v368, %v367
    %v439 = vpack.c.b16 %v370, %v369
    %v440 = vpack.c.b16 %v372, %v371
    %v441 = vpack.c.b16 %v374, %v373
    %v442 = vpack.c.b16 %v376, %v375
    %v443 = vpack.c.b16 %v378, %v377
    %v444 = vpack.c.b16 %v380, %v379
    %v445 = vpack.c.b16 %v382, %v381
    %v446 = vpack.c.b16 %v384, %v383
    %v447 = vpack.c.b16 %v386, %v385
    %v448 = vpack.c.b16 %v388, %v387
    %v449 = vpack.c.b16 %v390, %v389
    %v450 = vpack.c.b16 %v392, %v391
    %v451 = vpack.c.b16 %v394, %v393
    %v452 = vpack.c.b16 %v396, %v395
    %v453 = vpack.c.b16 %v398, %v397
    %v454 = vpack.c.b16 %v400, %v399
    %v455 = vpack.c.b16 %v402, %v401
    %v456 = vpack.c.b16 %v404, %v403
    %v457 = vpack.c.b16 %v406, %v405
    %v458 = vpack.c.b16 %v408, %v407
    %v459 = vpack.c.b16 %v410, %v409
    %vm509 = vcmask 130048
    %v511 = vsel %vm509, %v114, 0
    %513 = vmatpush.bf16.msra.mxu0 %v418
    %514 = vmatpush.bf16.msra.mxu0 %v417
    %515 = vmatpush.bf16.msra.mxu0 %v416
    %516 = vmatpush.bf16.msra.mxu0 %v415
    %517 = vmatpush.bf16.msra.mxu0 %v414
    %518 = vmatpush.bf16.msra.mxu0 %v413
    %519 = vmatpush.bf16.msra.mxu0 %v412
    %520 = vmatpush.bf16.msra.mxu0 %v411
    %521 = vmatmul.bf16.gmra.mxu0 %v108
    %v522 = vpop.f32.mrf.mxu0
    %v523 = vadd.f32 %v214, %v522
    %v524 = vpop.f32.mrf.mxu0
    %525 = vdwg.mxu0
    %526 = vmatpush.bf16.msra.mxu0 %v426
    %527 = vmatpush.bf16.msra.mxu0 %v425
    %528 = vmatpush.bf16.msra.mxu0 %v424
    %529 = vmatpush.bf16.msra.mxu0 %v423
    %530 = vmatpush.bf16.msra.mxu0 %v422
    %531 = vmatpush.bf16.msra.mxu0 %v421
    %532 = vmatpush.bf16.msra.mxu0 %v420
    %533 = vmatpush.bf16.msra.mxu0 %v419
    %534 = vmatmul.bf16.gmra.mxu0 %v109
    %v535 = vpop.f32.mrf.mxu0
    %v536 = vadd.f32 %v523, %v535
    %v537 = vpop.f32.mrf.mxu0
    %538 = vdwg.mxu0
    %539 = vmatpush.bf16.msra.mxu0 %v434
    %540 = vmatpush.bf16.msra.mxu0 %v433
    %541 = vmatpush.bf16.msra.mxu0 %v432
    %542 = vmatpush.bf16.msra.mxu0 %v431
    %543 = vmatpush.bf16.msra.mxu0 %v430
    %544 = vmatpush.bf16.msra.mxu0 %v429
    %545 = vmatpush.bf16.msra.mxu0 %v428
    %546 = vmatpush.bf16.msra.mxu0 %v427
    %547 = vmatmul.bf16.gmra.mxu0 %v110
    %v548 = vpop.f32.mrf.mxu0
    %v549 = vadd.f32 %v536, %v548
    %v550 = vpop.f32.mrf.mxu0
    %551 = vdwg.mxu0
    %552 = vmatpush.bf16.msra.mxu0 %v442
    %553 = vmatpush.bf16.msra.mxu0 %v441
    %554 = vmatpush.bf16.msra.mxu0 %v440
    %555 = vmatpush.bf16.msra.mxu0 %v439
    %556 = vmatpush.bf16.msra.mxu0 %v438
    %557 = vmatpush.bf16.msra.mxu0 %v437
    %558 = vmatpush.bf16.msra.mxu0 %v436
    %559 = vmatpush.bf16.msra.mxu0 %v435
    %560 = vmatmul.bf16.gmra.mxu0 %v111
    %v561 = vpop.f32.mrf.mxu0
    %v562 = vadd.f32 %v549, %v561
    %v563 = vpop.f32.mrf.mxu0
    %564 = vdwg.mxu0
    %565 = vmatpush.bf16.msra.mxu0 %v450
    %566 = vmatpush.bf16.msra.mxu0 %v449
    %567 = vmatpush.bf16.msra.mxu0 %v448
    %568 = vmatpush.bf16.msra.mxu0 %v447
    %569 = vmatpush.bf16.msra.mxu0 %v446
    %570 = vmatpush.bf16.msra.mxu0 %v445
    %571 = vmatpush.bf16.msra.mxu0 %v444
    %572 = vmatpush.bf16.msra.mxu0 %v443
    %573 = vmatmul.bf16.gmra.mxu0 %v112
    %v574 = vpop.f32.mrf.mxu0
    %v575 = vadd.f32 %v562, %v574
    %v576 = vpop.f32.mrf.mxu0
    %577 = vdwg.mxu0
    %578 = vmatpush.bf16.msra.mxu0 %v458
    %579 = vmatpush.bf16.msra.mxu0 %v457
    %580 = vmatpush.bf16.msra.mxu0 %v456
    %581 = vmatpush.bf16.msra.mxu0 %v455
    %582 = vmatpush.bf16.msra.mxu0 %v454
    %583 = vmatpush.bf16.msra.mxu0 %v453
    %584 = vmatpush.bf16.msra.mxu0 %v452
    %585 = vmatpush.bf16.msra.mxu0 %v451
    %586 = vmatmul.bf16.gmra.mxu0 %v113
    %v587 = vpop.f32.mrf.mxu0
    %v588 = vadd.f32 %v575, %v587
    %v589 = vpop.f32.mrf.mxu0
    %590 = vdwg.mxu0
    %591 = vmatpush.bf16.msra.mxu0 0
    %592 = vmatpush.bf16.msra.mxu0 0
    %593 = vmatpush.bf16.msra.mxu0 0
    %594 = vmatpush.bf16.msra.mxu0 0
    %595 = vmatpush.bf16.msra.mxu0 0
    %596 = vmatpush.bf16.msra.mxu0 0
    %597 = vmatpush.bf16.msra.mxu0 0
    %598 = vmatpush.bf16.msra.mxu0 %v459
    %599 = vmatmul.bf16.gmra.mxu0 %v511
    %v600 = vpop.f32.mrf.mxu0
    %v601 = vadd.f32 %v588, %v600
    %v602 = vpop.f32.mrf.mxu0
    %603 = vdwg.mxu0
    %v604 = vmax.f32 %v601, 0.0
    %v605 = vpack.c.bf16 %v604, %v604
    %v606 = vld [vmem:[#allocation7] sm:$0xf]
    %v607 = vld [vmem:[#allocation7 + $0x4] sm:$0xf]
    %v608 = vld [vmem:[#allocation7 + $0x8] sm:$0xf]
    %v609 = vld [vmem:[#allocation7 + $0xc] sm:$0xf]
    %v610 = vld [vmem:[#allocation7 + $0x10] sm:$0xf]
    %v611 = vld [vmem:[#allocation7 + $0x14] sm:$0xf]
    %v612 = vld [vmem:[#allocation7 + $0x18] sm:$0xf]
    %v613 = vld [vmem:[#allocation7 + $0x1c] sm:$0xf]
    %v614 = vld [vmem:[#allocation7 + $0x20] sm:$0xf]
    %v615 = vld [vmem:[#allocation7 + $0x24] sm:$0xf]
    %v616 = vld [vmem:[#allocation7 + $0x28] sm:$0xf]
    %v617 = vld [vmem:[#allocation7 + $0x2c] sm:$0xf]
    %v618 = vld [vmem:[#allocation7 + $0x30] sm:$0xf]
    %v619 = vld [vmem:[#allocation7 + $0x34] sm:$0xf]
    %v620 = vld [vmem:[#allocation7 + $0x38] sm:$0xf]
    %v621 = vld [vmem:[#allocation7 + $0x3c] sm:$0xf]
    %v622 = vld [vmem:[%s5 + $0x1] sm:$0x1]
    %v623 = vperm.slane %v622, 0
    %v640 = vunpack.c.l.b16 %v606
    %v641 = vunpack.c.l.b16 %v607
    %v642 = vunpack.c.l.b16 %v608
    %v643 = vunpack.c.l.b16 %v609
    %v644 = vunpack.c.l.b16 %v610
    %v645 = vunpack.c.l.b16 %v611
    %v646 = vunpack.c.l.b16 %v612
    %v647 = vunpack.c.l.b16 %v613
    %v648 = vunpack.c.l.b16 %v614
    %v649 = vunpack.c.l.b16 %v615
    %v650 = vunpack.c.l.b16 %v616
    %v651 = vunpack.c.l.b16 %v617
    %v652 = vunpack.c.l.b16 %v618
    %v653 = vunpack.c.l.b16 %v619
    %v654 = vunpack.c.l.b16 %v620
    %v655 = vunpack.c.l.b16 %v621
    %v656 = vpack.c.b16 %v641, %v640
    %v657 = vpack.c.b16 %v643, %v642
    %v658 = vpack.c.b16 %v645, %v644
    %v659 = vpack.c.b16 %v647, %v646
    %v660 = vpack.c.b16 %v649, %v648
    %v661 = vpack.c.b16 %v651, %v650
    %v662 = vpack.c.b16 %v653, %v652
    %v663 = vpack.c.b16 %v655, %v654
    %672 = vmatpush.bf16.msra.mxu0 %v663
    %673 = vmatpush.bf16.msra.mxu0 %v662
    %674 = vmatpush.bf16.msra.mxu0 %v661
    %675 = vmatpush.bf16.msra.mxu0 %v660
    %676 = vmatpush.bf16.msra.mxu0 %v659
    %677 = vmatpush.bf16.msra.mxu0 %v658
    %678 = vmatpush.bf16.msra.mxu0 %v657
    %679 = vmatpush.bf16.msra.mxu0 %v656
    %680 = vmatmul.bf16.gmra.mxu0 %v605
    %v681 = vpop.f32.mrf.mxu0
    %v682 = vadd.f32 %v623, %v681
    %v683 = vpop.f32.mrf.mxu0
    %684 = vdwg.mxu0
    %v685 = vxor.u32 %v682, 2147483648
    %v686 = vmul.f32 %v685, 1.442695
    %v687 = vpow.pop %v686
    %v688 = vadd.f32 %v687, 1.0
    %v689 = vrcp.pop %v688
    %v690 = vmul.f32 %v688, %v689
    %v691 = vsub.f32 1.0, %v690
    %v692 = vmul.f32 %v689, %v691
    %v693 = vadd.f32 %v689, %v692
    %vm694 = vweird.f32 %v688
    %vm695 = vweird.f32 %v689
    %vm696 = vmor %vm694, %vm695
    %v697 = vsel %vm696, %v689, %v693
    %v698 = vand.u32 2147483647, %v688
    %vm699 = vcmp.eq.f32.partialorder %v698, 8.507059e+37
    %v700 = vand.u32 %v688, 2147483648
    %v701 = vor.u32 1.1754944e-38, %v700
    %v702 = vsel %vm699, %v701, %v697
    %v703 = vmul.f32 1.0, %v702
    %v704 = vpack.c.bf16 %v703, %v703
    %v705 = vld [vmem:[#allocation8] sm:$0xf]
    %v706 = vld [vmem:[#allocation8 + $0x4] sm:$0xf]
    %v707 = vld [vmem:[#allocation8 + $0x8] sm:$0xf]
    %v708 = vld [vmem:[#allocation8 + $0xc] sm:$0xf]
    %v709 = vld [vmem:[#allocation8 + $0x10] sm:$0xf]
    %v710 = vld [vmem:[#allocation8 + $0x14] sm:$0xf]
    %v711 = vld [vmem:[#allocation8 + $0x18] sm:$0xf]
    %v712 = vld [vmem:[#allocation8 + $0x1c] sm:$0xf]
    %v713 = vld [vmem:[#allocation8 + $0x20] sm:$0xf]
    %v714 = vld [vmem:[#allocation8 + $0x24] sm:$0xf]
    %v715 = vld [vmem:[#allocation8 + $0x28] sm:$0xf]
    %v716 = vld [vmem:[#allocation8 + $0x2c] sm:$0xf]
    %v717 = vld [vmem:[#allocation8 + $0x30] sm:$0xf]
    %v718 = vld [vmem:[#allocation8 + $0x34] sm:$0xf]
    %v719 = vld [vmem:[#allocation8 + $0x38] sm:$0xf]
    %v720 = vld [vmem:[#allocation8 + $0x3c] sm:$0xf]
    %v721 = vld [vmem:[%s5 + $0x2] sm:$0x1]
    %v722 = vperm.slane %v721, 0
    %v739 = vunpack.c.l.b16 %v705
    %v740 = vunpack.c.l.b16 %v706
    %v741 = vunpack.c.l.b16 %v707
    %v742 = vunpack.c.l.b16 %v708
    %v743 = vunpack.c.l.b16 %v709
    %v744 = vunpack.c.l.b16 %v710
    %v745 = vunpack.c.l.b16 %v711
    %v746 = vunpack.c.l.b16 %v712
    %v747 = vunpack.c.l.b16 %v713
    %v748 = vunpack.c.l.b16 %v714
    %v749 = vunpack.c.l.b16 %v715
    %v750 = vunpack.c.l.b16 %v716
    %v751 = vunpack.c.l.b16 %v717
    %v752 = vunpack.c.l.b16 %v718
    %v753 = vunpack.c.l.b16 %v719
    %v754 = vunpack.c.l.b16 %v720
    %v755 = vpack.c.b16 %v740, %v739
    %v756 = vpack.c.b16 %v742, %v741
    %v757 = vpack.c.b16 %v744, %v743
    %v758 = vpack.c.b16 %v746, %v745
    %v759 = vpack.c.b16 %v748, %v747
    %v760 = vpack.c.b16 %v750, %v749
    %v761 = vpack.c.b16 %v752, %v751
    %v762 = vpack.c.b16 %v754, %v753
    %771 = vmatpush.bf16.msra.mxu0 %v762
    %772 = vmatpush.bf16.msra.mxu0 %v761
    %773 = vmatpush.bf16.msra.mxu0 %v760
    %774 = vmatpush.bf16.msra.mxu0 %v759
    %775 = vmatpush.bf16.msra.mxu0 %v758
    %776 = vmatpush.bf16.msra.mxu0 %v757
    %777 = vmatpush.bf16.msra.mxu0 %v756
    %778 = vmatpush.bf16.msra.mxu0 %v755
    %779 = vmatmul.bf16.gmra.mxu0 %v704
    %v780 = vpop.f32.mrf.mxu0
    %v781 = vadd.f32 %v722, %v780
    %v782 = vpop.f32.mrf.mxu0
    %783 = vdwg.mxu0
    %v784 = vmax.f32 %v781, 0.0
    %v785 = vpack.c.bf16 %v784, %v784
    %v786 = vld [vmem:[#allocation10] sm:$0xf]
    %v787 = vld [vmem:[#allocation10 + $0x4] sm:$0xf]
    %v788 = vld [vmem:[#allocation10 + $0x8] sm:$0xf]
    %v789 = vld [vmem:[#allocation10 + $0xc] sm:$0xf]
    %v790 = vld [vmem:[#allocation10 + $0x10] sm:$0xf]
    %v791 = vld [vmem:[#allocation10 + $0x14] sm:$0xf]
    %v792 = vld [vmem:[#allocation10 + $0x18] sm:$0xf]
    %v793 = vld [vmem:[#allocation10 + $0x1c] sm:$0xf]
    %v794 = vld [vmem:[#allocation10 + $0x20] sm:$0xf]
    %v795 = vld [vmem:[#allocation10 + $0x24] sm:$0xf]
    %v796 = vld [vmem:[#allocation10 + $0x28] sm:$0xf]
    %v797 = vld [vmem:[#allocation10 + $0x2c] sm:$0xf]
    %v798 = vld [vmem:[#allocation10 + $0x30] sm:$0xf]
    %v799 = vld [vmem:[#allocation10 + $0x34] sm:$0xf]
    %v800 = vld [vmem:[#allocation10 + $0x38] sm:$0xf]
    %v801 = vld [vmem:[#allocation10 + $0x3c] sm:$0xf]
    %v802 = vld [vmem:[%s5 + $0x3] sm:$0x1]
    %v803 = vperm.slane %v802, 0
    %v820 = vunpack.c.l.b16 %v786
    %v821 = vunpack.c.l.b16 %v787
    %v822 = vunpack.c.l.b16 %v788
    %v823 = vunpack.c.l.b16 %v789
    %v824 = vunpack.c.l.b16 %v790
    %v825 = vunpack.c.l.b16 %v791
    %v826 = vunpack.c.l.b16 %v792
    %v827 = vunpack.c.l.b16 %v793
    %v828 = vunpack.c.l.b16 %v794
    %v829 = vunpack.c.l.b16 %v795
    %v830 = vunpack.c.l.b16 %v796
    %v831 = vunpack.c.l.b16 %v797
    %v832 = vunpack.c.l.b16 %v798
    %v833 = vunpack.c.l.b16 %v799
    %v834 = vunpack.c.l.b16 %v800
    %v835 = vunpack.c.l.b16 %v801
    %v836 = vpack.c.b16 %v821, %v820
    %v837 = vpack.c.b16 %v823, %v822
    %v838 = vpack.c.b16 %v825, %v824
    %v839 = vpack.c.b16 %v827, %v826
    %v840 = vpack.c.b16 %v829, %v828
    %v841 = vpack.c.b16 %v831, %v830
    %v842 = vpack.c.b16 %v833, %v832
    %v843 = vpack.c.b16 %v835, %v834
    %852 = vmatpush.bf16.msra.mxu0 %v843
    %853 = vmatpush.bf16.msra.mxu0 %v842
    %854 = vmatpush.bf16.msra.mxu0 %v841
    %855 = vmatpush.bf16.msra.mxu0 %v840
    %856 = vmatpush.bf16.msra.mxu0 %v839
    %857 = vmatpush.bf16.msra.mxu0 %v838
    %858 = vmatpush.bf16.msra.mxu0 %v837
    %859 = vmatpush.bf16.msra.mxu0 %v836
    %860 = vmatmul.bf16.gmra.mxu0 %v785
    %v861 = vpop.f32.mrf.mxu0
    %v862 = vadd.f32 %v803, %v861
    %v863 = vpop.f32.mrf.mxu0
    %864 = vdwg.mxu0
    %v865 = vpack.c.bf16 %v862, %v862
    %866 = vst [vmem:[#allocation11] sm:$0xf] %v865
    // Predicated region
    $region46: #{tpu_custom_call.1} parent=1 // pred_check
      _
    $region47: #{tpu_custom_call.1} parent=1 // pred_check_branch
      %868 = sbr.rel (0) target = $region49
    $region48: #{tpu_custom_call.1} parent=1 // pred_region
      %870 = vsyncadd [#allocation4], 0
      %s872 = sshll.u32 [#allocation11], 4
      %s873 = int_to_ptr.vmem [resolvable:$true] %s872
      %s874 = sshll.u32 %s6, 4
      %s875 = int_to_ptr.hbm [resolvable:$true] %s874
      %877 = dma.vmem_to_hbm [thread:$0]  %s873, 64, %s875, [#allocation4]
    $region49: #{tpu_custom_call.1} parent=1 // pred_fallthru
      _
    // Predicated region
    $region50: #{tpu_custom_call.1} parent=1 // pred_check
      _
    $region51: #{tpu_custom_call.1} parent=1 // pred_check_branch
      %879 = sbr.rel (0) target = $region53
    $region52: #{tpu_custom_call.1} parent=1 // pred_region
      %881 = dma.done [#allocation4], 64
    $region53: #{tpu_custom_call.1} parent=1 // pred_fallthru
      _
    %882 = vsyncpa [#allocation3], 1
    %883 = vsyncpa [#allocation6], 1
    %884 = vsyncpa [#allocation9], 1
    %885 = vsyncpa [#allocation4], 1

</llo_original>
